<compile_context>
chip_gen: v6e
topology: v6e:2x2x1
jax: 0.10.0
libtpu: 0.0.40
codegen_flags: <defaults>
</compile_context>

<pallas_src>
import functools
import math

import jax
import jax.numpy as jnp
from jax import lax
from jax.experimental import pallas as pl
from jax.experimental.pallas import tpu as pltpu

LANE = 128


def _round_up(n, m):
    return ((n + m - 1) // m) * m


def _apply_activation(h, activate_fun_type):
    if activate_fun_type == "ReLU":
        return jnp.maximum(h, 0.0)
    elif activate_fun_type == "GELU":
        # torch.nn.GELU() default = exact (erf) gelu
        return 0.5 * h * (1.0 + lax.erf(h * (1.0 / math.sqrt(2.0))))
    elif activate_fun_type == "ELU":
        return jnp.where(h > 0, h, jnp.expm1(h))
    elif activate_fun_type == "LeakyReLU":
        return jnp.where(h > 0, h, 0.01 * h)
    else:
        raise ValueError("Invalid `activate_fun_type`.")


# ----------------------------------------------------------------------------
# Fused kernel: whole MLP forward for one batch tile.
# ----------------------------------------------------------------------------
def mlp_fused_kernel(*refs, real_out_dims, activate_fun_type, use_layer_normal):
    """
    refs = (x_ref, w0, p0, w1, p1, ..., w_{L-1}, p_{L-1}, o_ref)
      x_ref : [tm, d_in]                 (one batch tile)
      w_i   : [d_in_pad_i, d_out_pad_i]  (torch weight transposed, zero-padded)
      p_i   : hidden -> [3, d_out_pad_i] rows = (bias, gamma, beta), zero-padded
              final  -> [1, d_out_pad_L] row  = (bias,)
    Padded lanes stay identically 0 through every layer.
    """
    x_ref = refs[0]
    o_ref = refs[-1]
    param_refs = refs[1:-1]
    n_layers = len(param_refs) // 2

    h = x_ref[...]
    for i in range(n_layers):
        w_ref = param_refs[2 * i]
        p_ref = param_refs[2 * i + 1]
        # Intermediates live in vregs/VMEM only -- no HBM round trips.
        h = jnp.dot(h, w_ref[...], preferred_element_type=jnp.float32)
        h = h + p_ref[0:1, :]                                   # bias
        if i < n_layers - 1:                                    # hidden layer
            h = _apply_activation(h, activate_fun_type)
            if use_layer_normal:
                d_real = real_out_dims[i]
                d_pad = h.shape[-1]
                # Masked statistics over the real width (padded lanes are 0
                # but must not contribute to mean/var).
                mean = jnp.sum(h, axis=-1, keepdims=True) * (1.0 / d_real)
                if d_real == d_pad:
                    diff = h - mean
                else:
                    mask = lax.broadcasted_iota(jnp.int32, (1, d_pad), 1) < d_real
                    diff = jnp.where(mask, h - mean, 0.0)
                var = jnp.sum(diff * diff, axis=-1, keepdims=True) * (1.0 / d_real)
                h = diff * lax.rsqrt(var + 1e-7)                # eps = 1e-07 (matches module)
                h = h * p_ref[1:2, :] + p_ref[2:3, :]           # affine; pad stays 0
            # dropout_rate == 0.0 -> identity.
            # TODO(synk): training-mode dropout (rate > 0) would need
            # pltpu.prng_seed / pltpu.prng_random_bits; not part of this eval fwd.
    o_ref[...] = h.astype(o_ref.dtype)


# ----------------------------------------------------------------------------
# Wrapper: batch-tiled pallas_call; weights resident, x/y pipelined.
# ----------------------------------------------------------------------------
def mlp_forward_pallas(packed_params, x, *, output_dim, real_out_dims,
                       activate_fun_type, use_layer_normal, block_m=128):
    B, d_in = x.shape
    d_out_pad = packed_params[-2].shape[-1]   # last weight's padded out dim

    # Batch tile: sublane aligned (multiple of 8), capped at block_m.
    tm = min(block_m, _round_up(B, 8))
    B_pad = _round_up(B, tm)
    if B_pad != B:
        x = jnp.pad(x, ((0, B_pad - B), (0, 0)))
    n_m = B_pad // tm

    kernel = functools.partial(
        mlp_fused_kernel,
        real_out_dims=tuple(real_out_dims),
        activate_fun_type=activate_fun_type,
        use_layer_normal=use_layer_normal,
    )

    in_specs = [pl.BlockSpec((tm, d_in), lambda m: (m, 0))]
    for p in packed_params:
        # Full-array block with a constant index_map: fetched into VMEM once,
        # never re-DMA'd across batch tiles.
        in_specs.append(pl.BlockSpec(p.shape, lambda m: (0, 0)))

    y_pad = pl.pallas_call(
        kernel,
        out_shape=jax.ShapeDtypeStruct((B_pad, d_out_pad), jnp.float32),
        grid=(n_m,),
        in_specs=in_specs,
        out_specs=pl.BlockSpec((tm, d_out_pad), lambda m: (m, 0)),
        compiler_params=pltpu.CompilerParams(
            dimension_semantics=("parallel",)),
    )(x, *packed_params)
    return y_pad[:B, :output_dim]


# ----------------------------------------------------------------------------
# Parameters (torch.nn.Linear-style init) and one-time padding/packing.
# ----------------------------------------------------------------------------
def init_mlp_params(key, input_dim, output_dim, middle_dim_list, use_layer_normal):
    dims = [input_dim] + list(middle_dim_list) + [output_dim]
    params = []
    for i in range(len(dims) - 1):
        d_in, d_out = dims[i], dims[i + 1]
        key, kw, kb = jax.random.split(key, 3)
        bound = 1.0 / math.sqrt(d_in)
        # stored as [d_in, d_out] == torch Linear weight.T
        w = jax.random.uniform(kw, (d_in, d_out), jnp.float32, -bound, bound)
        b = jax.random.uniform(kb, (d_out,), jnp.float32, -bound, bound)
        layer = {"w": w, "b": b}
        if use_layer_normal and i < len(dims) - 2:
            layer["gamma"] = jnp.ones((d_out,), jnp.float32)
            layer["beta"] = jnp.zeros((d_out,), jnp.float32)
        params.append(layer)
    return params


def pack_params_for_pallas(params, use_layer_normal):
    """Pad feature (lane) dims to multiples of 128 and pack bias/gamma/beta
    into one operand per layer. Done once, outside the kernel."""
    packed = []
    real_out_dims = []
    prev_pad = None
    for i, layer in enumerate(params):
        d_in, d_out = layer["w"].shape
        d_in_pad = prev_pad if prev_pad is not None else d_in
        d_out_pad = _round_up(d_out, LANE)
        w = jnp.zeros((d_in_pad, d_out_pad), jnp.float32)
        w = w.at[:d_in, :d_out].set(layer["w"])
        if i < len(params) - 1:  # hidden layer: pack (bias, gamma, beta)
            p = jnp.zeros((3, d_out_pad), jnp.float32)
            p = p.at[0, :d_out].set(layer["b"])
            if use_layer_normal:
                p = p.at[1, :d_out].set(layer["gamma"])
                p = p.at[2, :d_out].set(layer["beta"])
        else:                    # final layer: bias only
            p = jnp.zeros((1, d_out_pad), jnp.float32)
            p = p.at[0, :d_out].set(layer["b"])
        packed += [w, p]
        real_out_dims.append(d_out)
        prev_pad = d_out_pad
    return packed, real_out_dims


# ----------------------------------------------------------------------------
# Pure-JAX reference (all activation types) for correctness checks.
# ----------------------------------------------------------------------------
def mlp_reference(params, x, activate_fun_type, use_layer_normal):
    def act(h):
        if activate_fun_type == "ReLU":
            return jnp.maximum(h, 0.0)
        if activate_fun_type == "GELU":
            return 0.5 * h * (1.0 + lax.erf(h * (1.0 / math.sqrt(2.0))))
        if activate_fun_type == "ELU":
            return jnp.where(h > 0, h, jnp.expm1(h))
        if activate_fun_type == "LeakyReLU":
            return jnp.where(h > 0, h, 0.01 * h)
        raise ValueError("Invalid `activate_fun_type`.")

    for layer in params[:-1]:
        h = x @ layer["w"] + layer["b"]
        h = act(h)
        if use_layer_normal:
            mean = jnp.mean(h, axis=-1, keepdims=True)
            var = jnp.mean(jnp.square(h - mean), axis=-1, keepdims=True)
            h = (h - mean) * lax.rsqrt(var + 1e-7)
            h = h * layer["gamma"] + layer["beta"]
        x = h
    return x @ params[-1]["w"] + params[-1]["b"]


def _run_case(key, B, input_dim, output_dim, middle_dim_list,
              activate_fun_type, use_layer_normal):
    key_x, key_p = jax.random.split(key)
    x = jax.random.normal(key_x, (B, input_dim), jnp.float32)
    params = init_mlp_params(key_p, input_dim, output_dim, middle_dim_list,
                             use_layer_normal)
    packed, real_out_dims = pack_params_for_pallas(params, use_layer_normal)

    y = mlp_forward_pallas(packed, x, output_dim=output_dim,
                           real_out_dims=real_out_dims,
                           activate_fun_type=activate_fun_type,
                           use_layer_normal=use_layer_normal)
    y = jax.block_until_ready(y)

    y_ref = mlp_reference(params, x, activate_fun_type, use_layer_normal)
    assert y.shape == (B, output_dim)
    assert jnp.allclose(y, y_ref, atol=1e-5, rtol=1e-5), (
        f"mismatch vs reference ({activate_fun_type}, LN={use_layer_normal}, B={B})")
    return y


if __name__ == "__main__":
    # Config consistent with the module:
    #   MLP(input_dim=32, output_dim=16, middle_dim_list=[64, 48],
    #       activate_fun_type='ReLU', dropout_rate=0.0, use_layer_normal=True)
    input_dim, output_dim = 32, 16
    middle_dim_list = [64, 48]

    key = jax.random.PRNGKey(0)
    k1, k2, k3 = jax.random.split(key, 3)

    # Main case: ReLU + LayerNorm, small batch (single tile).
    _run_case(k1, 8, input_dim, output_dim, middle_dim_list,
              activate_fun_type="ReLU", use_layer_normal=True)
    # Secondary sanity check: GELU path, no LayerNorm.
    _run_case(k2, 8, input_dim, output_dim, middle_dim_list,
              activate_fun_type="GELU", use_layer_normal=False)
    # Exercise the batch-tiled grid (>1 tiles, megacore-parallel axis).
    _run_case(k3, 256, input_dim, output_dim, middle_dim_list,
              activate_fun_type="ELU", use_layer_normal=True)

    print("KERNEL_OK")
</pallas_src>

<mosaic_0001>
module attributes {stable_mosaic.version = 11 : i64} {
  func.func @mlp_fused_kernel(%arg0: i32, %arg1: memref<8x32xf32, #tpu.memory_space<vmem>>, %arg2: memref<32x128xf32, #tpu.memory_space<vmem>>, %arg3: memref<3x128xf32, #tpu.memory_space<vmem>>, %arg4: memref<128x128xf32, #tpu.memory_space<vmem>>, %arg5: memref<3x128xf32, #tpu.memory_space<vmem>>, %arg6: memref<128x128xf32, #tpu.memory_space<vmem>>, %arg7: memref<1x128xf32, #tpu.memory_space<vmem>>, %arg8: memref<8x128xf32, #tpu.memory_space<vmem>>) attributes {dimension_semantics = [#tpu.dimension_semantics<parallel>], iteration_bounds = array<i64: 1>, scalar_prefetch = 0 : i64, scratch_operands = 0 : i64, tpu.core_type = #tpu.core_type<tc>, window_params = [{transform_indices = @transform_0, window_bounds = array<i64: 8, 32>}, {pipeline_mode = #tpu.pipeline_mode<synchronous>, transform_indices = @transform_1, window_bounds = array<i64: 32, 128>}, {pipeline_mode = #tpu.pipeline_mode<synchronous>, transform_indices = @transform_2, window_bounds = array<i64: 3, 128>}, {pipeline_mode = #tpu.pipeline_mode<synchronous>, transform_indices = @transform_3, window_bounds = array<i64: 128, 128>}, {pipeline_mode = #tpu.pipeline_mode<synchronous>, transform_indices = @transform_4, window_bounds = array<i64: 3, 128>}, {pipeline_mode = #tpu.pipeline_mode<synchronous>, transform_indices = @transform_5, window_bounds = array<i64: 128, 128>}, {pipeline_mode = #tpu.pipeline_mode<synchronous>, transform_indices = @transform_6, window_bounds = array<i64: 1, 128>}, {transform_indices = @transform_7, window_bounds = array<i64: 8, 128>}]} {
    %c0 = arith.constant 0 : index
    %c0_0 = arith.constant 0 : index
    %0 = vector.load %arg1[%c0, %c0_0] : memref<8x32xf32, #tpu.memory_space<vmem>>, vector<8x32xf32>
    %c0_1 = arith.constant 0 : index
    %c0_2 = arith.constant 0 : index
    %1 = vector.load %arg2[%c0_1, %c0_2] : memref<32x128xf32, #tpu.memory_space<vmem>>, vector<32x128xf32>
    %cst = arith.constant dense<0.000000e+00> : vector<8x128xf32>
    %2 = tpu.matmul %0, %1, %cst {dimension_numbers = #tpu.dot_dimension_numbers<[1], [0], [0], [1], [0, 0, 1, 1], [], []>} : vector<8x32xf32>, vector<32x128xf32>, vector<8x128xf32> -> vector<8x128xf32>
    %c0_3 = arith.constant 0 : index
    %c0_4 = arith.constant 0 : index
    %3 = vector.load %arg3[%c0_3, %c0_4] : memref<3x128xf32, #tpu.memory_space<vmem>>, vector<1x128xf32>
    %4 = vector.broadcast %3 : vector<1x128xf32> to vector<8x128xf32>
    %5 = arith.addf %2, %4 : vector<8x128xf32>
    %cst_5 = arith.constant 0.000000e+00 : f32
    %6 = vector.broadcast %cst_5 : f32 to vector<8x128xf32>
    %7 = arith.maximumf %5, %6 : vector<8x128xf32>
    %cst_6 = arith.constant dense<0.000000e+00> : vector<8xf32>
    %8 = vector.multi_reduction <add>, %7, %cst_6 [1] : vector<8x128xf32> to vector<8xf32>
    %9 = vector.shape_cast %8 : vector<8xf32> to vector<8x1xf32>
    %cst_7 = arith.constant 1.562500e-02 : f32
    %10 = vector.broadcast %cst_7 : f32 to vector<8x1xf32>
    %11 = arith.mulf %9, %10 : vector<8x1xf32>
    %12 = tpu.iota {dimensions = array<i32: 1>} : vector<1x128xi32>
    %c64_i32 = arith.constant 64 : i32
    %13 = vector.broadcast %c64_i32 : i32 to vector<1x128xi32>
    %14 = arith.cmpi slt, %12, %13 : vector<1x128xi32>
    %15 = vector.broadcast %11 : vector<8x1xf32> to vector<8x128xf32>
    %16 = arith.subf %7, %15 : vector<8x128xf32>
    %cst_8 = arith.constant 0.000000e+00 : f32
    %17 = vector.shape_cast %14 : vector<1x128xi1> to vector<1x128xi1>
    %18 = vector.broadcast %17 : vector<1x128xi1> to vector<8x128xi1>
    %19 = vector.broadcast %cst_8 : f32 to vector<8x128xf32>
    %20 = arith.select %18, %16, %19 : vector<8x128xi1>, vector<8x128xf32>
    %21 = arith.mulf %20, %20 : vector<8x128xf32>
    %cst_9 = arith.constant dense<0.000000e+00> : vector<8xf32>
    %22 = vector.multi_reduction <add>, %21, %cst_9 [1] : vector<8x128xf32> to vector<8xf32>
    %23 = vector.shape_cast %22 : vector<8xf32> to vector<8x1xf32>
    %cst_10 = arith.constant 1.562500e-02 : f32
    %24 = vector.broadcast %cst_10 : f32 to vector<8x1xf32>
    %25 = arith.mulf %23, %24 : vector<8x1xf32>
    %cst_11 = arith.constant 1.000000e-07 : f32
    %26 = vector.broadcast %cst_11 : f32 to vector<8x1xf32>
    %27 = arith.addf %25, %26 : vector<8x1xf32>
    %28 = math.rsqrt %27 : vector<8x1xf32>
    %29 = vector.broadcast %28 : vector<8x1xf32> to vector<8x128xf32>
    %30 = arith.mulf %20, %29 : vector<8x128xf32>
    %c1 = arith.constant 1 : index
    %c0_12 = arith.constant 0 : index
    %31 = vector.load %arg3[%c1, %c0_12] : memref<3x128xf32, #tpu.memory_space<vmem>>, vector<1x128xf32>
    %32 = vector.broadcast %31 : vector<1x128xf32> to vector<8x128xf32>
    %33 = arith.mulf %30, %32 : vector<8x128xf32>
    %c2 = arith.constant 2 : index
    %c0_13 = arith.constant 0 : index
    %34 = vector.load %arg3[%c2, %c0_13] : memref<3x128xf32, #tpu.memory_space<vmem>>, vector<1x128xf32>
    %35 = vector.broadcast %34 : vector<1x128xf32> to vector<8x128xf32>
    %36 = arith.addf %33, %35 : vector<8x128xf32>
    %c0_14 = arith.constant 0 : index
    %c0_15 = arith.constant 0 : index
    %37 = vector.load %arg4[%c0_14, %c0_15] : memref<128x128xf32, #tpu.memory_space<vmem>>, vector<128x128xf32>
    %cst_16 = arith.constant dense<0.000000e+00> : vector<8x128xf32>
    %38 = tpu.matmul %36, %37, %cst_16 {dimension_numbers = #tpu.dot_dimension_numbers<[1], [0], [0], [1], [0, 0, 1, 1], [], []>} : vector<8x128xf32>, vector<128x128xf32>, vector<8x128xf32> -> vector<8x128xf32>
    %c0_17 = arith.constant 0 : index
    %c0_18 = arith.constant 0 : index
    %39 = vector.load %arg5[%c0_17, %c0_18] : memref<3x128xf32, #tpu.memory_space<vmem>>, vector<1x128xf32>
    %40 = vector.broadcast %39 : vector<1x128xf32> to vector<8x128xf32>
    %41 = arith.addf %38, %40 : vector<8x128xf32>
    %cst_19 = arith.constant 0.000000e+00 : f32
    %42 = vector.broadcast %cst_19 : f32 to vector<8x128xf32>
    %43 = arith.maximumf %41, %42 : vector<8x128xf32>
    %cst_20 = arith.constant dense<0.000000e+00> : vector<8xf32>
    %44 = vector.multi_reduction <add>, %43, %cst_20 [1] : vector<8x128xf32> to vector<8xf32>
    %45 = vector.shape_cast %44 : vector<8xf32> to vector<8x1xf32>
    %cst_21 = arith.constant 0.020833334 : f32
    %46 = vector.broadcast %cst_21 : f32 to vector<8x1xf32>
    %47 = arith.mulf %45, %46 : vector<8x1xf32>
    %48 = tpu.iota {dimensions = array<i32: 1>} : vector<1x128xi32>
    %c48_i32 = arith.constant 48 : i32
    %49 = vector.broadcast %c48_i32 : i32 to vector<1x128xi32>
    %50 = arith.cmpi slt, %48, %49 : vector<1x128xi32>
    %51 = vector.broadcast %47 : vector<8x1xf32> to vector<8x128xf32>
    %52 = arith.subf %43, %51 : vector<8x128xf32>
    %cst_22 = arith.constant 0.000000e+00 : f32
    %53 = vector.shape_cast %50 : vector<1x128xi1> to vector<1x128xi1>
    %54 = vector.broadcast %53 : vector<1x128xi1> to vector<8x128xi1>
    %55 = vector.broadcast %cst_22 : f32 to vector<8x128xf32>
    %56 = arith.select %54, %52, %55 : vector<8x128xi1>, vector<8x128xf32>
    %57 = arith.mulf %56, %56 : vector<8x128xf32>
    %cst_23 = arith.constant dense<0.000000e+00> : vector<8xf32>
    %58 = vector.multi_reduction <add>, %57, %cst_23 [1] : vector<8x128xf32> to vector<8xf32>
    %59 = vector.shape_cast %58 : vector<8xf32> to vector<8x1xf32>
    %cst_24 = arith.constant 0.020833334 : f32
    %60 = vector.broadcast %cst_24 : f32 to vector<8x1xf32>
    %61 = arith.mulf %59, %60 : vector<8x1xf32>
    %cst_25 = arith.constant 1.000000e-07 : f32
    %62 = vector.broadcast %cst_25 : f32 to vector<8x1xf32>
    %63 = arith.addf %61, %62 : vector<8x1xf32>
    %64 = math.rsqrt %63 : vector<8x1xf32>
    %65 = vector.broadcast %64 : vector<8x1xf32> to vector<8x128xf32>
    %66 = arith.mulf %56, %65 : vector<8x128xf32>
    %c1_26 = arith.constant 1 : index
    %c0_27 = arith.constant 0 : index
    %67 = vector.load %arg5[%c1_26, %c0_27] : memref<3x128xf32, #tpu.memory_space<vmem>>, vector<1x128xf32>
    %68 = vector.broadcast %67 : vector<1x128xf32> to vector<8x128xf32>
    %69 = arith.mulf %66, %68 : vector<8x128xf32>
    %c2_28 = arith.constant 2 : index
    %c0_29 = arith.constant 0 : index
    %70 = vector.load %arg5[%c2_28, %c0_29] : memref<3x128xf32, #tpu.memory_space<vmem>>, vector<1x128xf32>
    %71 = vector.broadcast %70 : vector<1x128xf32> to vector<8x128xf32>
    %72 = arith.addf %69, %71 : vector<8x128xf32>
    %c0_30 = arith.constant 0 : index
    %c0_31 = arith.constant 0 : index
    %73 = vector.load %arg6[%c0_30, %c0_31] : memref<128x128xf32, #tpu.memory_space<vmem>>, vector<128x128xf32>
    %cst_32 = arith.constant dense<0.000000e+00> : vector<8x128xf32>
    %74 = tpu.matmul %72, %73, %cst_32 {dimension_numbers = #tpu.dot_dimension_numbers<[1], [0], [0], [1], [0, 0, 1, 1], [], []>} : vector<8x128xf32>, vector<128x128xf32>, vector<8x128xf32> -> vector<8x128xf32>
    %c0_33 = arith.constant 0 : index
    %c0_34 = arith.constant 0 : index
    %75 = vector.load %arg7[%c0_33, %c0_34] : memref<1x128xf32, #tpu.memory_space<vmem>>, vector<1x128xf32>
    %76 = vector.broadcast %75 : vector<1x128xf32> to vector<8x128xf32>
    %77 = arith.addf %74, %76 : vector<8x128xf32>
    %c0_35 = arith.constant 0 : index
    %c0_36 = arith.constant 0 : index
    %78 = vector.load %arg8[%c0_35, %c0_36] : memref<8x128xf32, #tpu.memory_space<vmem>>, vector<8x128xf32>
    tpu.vector_store %arg8[%c0_35, %c0_36], %77 {strides = array<i32>} : memref<8x128xf32, #tpu.memory_space<vmem>>, vector<8x128xf32>,
    return
  }
  func.func @transform_0(%arg0: i32) -> (i32, i32) {
    %c0_i32 = arith.constant 0 : i32
    %c0_i32_0 = arith.constant 0 : i32
    return %arg0, %c0_i32 : i32, i32
  }
  func.func @transform_1(%arg0: i32) -> (i32, i32) {
    %c0_i32 = arith.constant 0 : i32
    %c0_i32_0 = arith.constant 0 : i32
    %c0_i32_1 = arith.constant 0 : i32
    return %c0_i32, %c0_i32_0 : i32, i32
  }
  func.func @transform_2(%arg0: i32) -> (i32, i32) {
    %c0_i32 = arith.constant 0 : i32
    %c0_i32_0 = arith.constant 0 : i32
    %c0_i32_1 = arith.constant 0 : i32
    return %c0_i32, %c0_i32_0 : i32, i32
  }
  func.func @transform_3(%arg0: i32) -> (i32, i32) {
    %c0_i32 = arith.constant 0 : i32
    %c0_i32_0 = arith.constant 0 : i32
    %c0_i32_1 = arith.constant 0 : i32
    return %c0_i32, %c0_i32_0 : i32, i32
  }
  func.func @transform_4(%arg0: i32) -> (i32, i32) {
    %c0_i32 = arith.constant 0 : i32
    %c0_i32_0 = arith.constant 0 : i32
    %c0_i32_1 = arith.constant 0 : i32
    return %c0_i32, %c0_i32_0 : i32, i32
  }
  func.func @transform_5(%arg0: i32) -> (i32, i32) {
    %c0_i32 = arith.constant 0 : i32
    %c0_i32_0 = arith.constant 0 : i32
    %c0_i32_1 = arith.constant 0 : i32
    return %c0_i32, %c0_i32_0 : i32, i32
  }
  func.func @transform_6(%arg0: i32) -> (i32, i32) {
    %c0_i32 = arith.constant 0 : i32
    %c0_i32_0 = arith.constant 0 : i32
    %c0_i32_1 = arith.constant 0 : i32
    return %c0_i32, %c0_i32_0 : i32, i32
  }
  func.func @transform_7(%arg0: i32) -> (i32, i32) {
    %c0_i32 = arith.constant 0 : i32
    %c0_i32_0 = arith.constant 0 : i32
    return %arg0, %c0_i32 : i32, i32
  }
}

</mosaic_0001>

<llo_original>
// kernel: tpu_custom_call.1
$region0: #{tpu_custom_call.1}
  #allocation0 [shape = 'u32[]', space=smem, size = 0x4, offset = 0x4, fixed_abs, tag = 'smem constant byte address 0x4 - core index']
  #allocation1 [shape = 'u32[144,128]{1,0:T(1,128)}', space=vmem, size = 0x12000, scoped, tag = 'internal scratch']
  %s0 = inlined_call_operand.hbm [shape: f32[8,32], index: 0, kind: input, shape index: {}]
  %s1 = inlined_call_operand.hbm [shape: f32[32,128], index: 1, kind: input, shape index: {}]
  %s2 = inlined_call_operand.hbm [shape: f32[3,128], index: 2, kind: input, shape index: {}]
  %s3 = inlined_call_operand.hbm [shape: f32[128,128], index: 3, kind: input, shape index: {}]
  %s4 = inlined_call_operand.vmem [shape: f32[3,128], index: 4, kind: input, shape index: {}]
  %s5 = inlined_call_operand.hbm [shape: f32[128,128], index: 5, kind: input, shape index: {}]
  %s6 = inlined_call_operand.vmem [shape: f32[1,128], index: 6, kind: input, shape index: {}]
  %s7 = inlined_call_operand.hbm [shape: f32[8,128], index: 7, kind: output, shape index: {}]
  %s8 = sld [smem:[#allocation0]]
  $region58: #{tpu_custom_call.1} parent=0
    _
  %s10 = ssub.s32 1, %s8
  %s11 = scalar_select 0, %s10, %s8
  $region1: #{tpu_custom_call.1} parent=0
    #allocation2 [shape = 'u8[4096]{0}', space=vmem, size = 0x1000, scoped, tag = 'input window, operand 0, single buffered']
    #allocation3 [shape = 's32[1]{0}', space=sflag, size = 0x4, scoped, tag = 'scoped memory for tpu_custom_call.1']
    #allocation4 [shape = 's32[1]{0}', space=sflag, size = 0x4, scoped, tag = 'scoped memory for tpu_custom_call.1']
    #allocation5 [shape = 'u8[16384]{0}', space=vmem, size = 0x4000, scoped, tag = 'input window, operand 1, single buffered']
    #allocation6 [shape = 's32[1]{0}', space=sflag, size = 0x4, scoped, tag = 'scoped memory for tpu_custom_call.1']
    #allocation7 [shape = 'u8[2048]{0}', space=vmem, size = 0x800, scoped, tag = 'input window, operand 2, single buffered']
    #allocation8 [shape = 'u8[65536]{0}', space=vmem, size = 0x10000, scoped, tag = 'input window, operand 3, single buffered']
    #allocation9 [shape = 's32[1]{0}', space=sflag, size = 0x4, scoped, tag = 'scoped memory for tpu_custom_call.1']
    #allocation10 [shape = 'u8[65536]{0}', space=vmem, size = 0x10000, scoped, tag = 'input window, operand 5, single buffered']
    #allocation11 [shape = 'u8[4096]{0}', space=vmem, size = 0x1000, scoped, tag = 'output window, operand 0, single buffered']
    %12 = vsyncpa [#allocation3], 0
    %13 = vsyncpa [#allocation6], 0
    %14 = vsyncpa [#allocation9], 0
    %15 = vsyncpa [#allocation4], 0
    // Predicated region
    $region2: #{tpu_custom_call.1} parent=1 // pred_check
      _
    $region3: #{tpu_custom_call.1} parent=1 // pred_check_branch
      %17 = sbr.rel (0) target = $region5
    $region4: #{tpu_custom_call.1} parent=1 // pred_region
      %s19 = ssub.s32 128, 128
      %20 = vsyncadd [#allocation3], %s19
      %s22 = sshll.u32 [#allocation2], 4
      %s23 = int_to_ptr.vmem [resolvable:$true] %s22
      %25 = dma.hbm_to_vmem [thread:$0]  %s0, 128, %s23, [#allocation3]
    $region5: #{tpu_custom_call.1} parent=1 // pred_fallthru
      _
    // Predicated region
    $region6: #{tpu_custom_call.1} parent=1 // pred_check
      _
    $region7: #{tpu_custom_call.1} parent=1 // pred_check_branch
      %27 = sbr.rel (0) target = $region9
    $region8: #{tpu_custom_call.1} parent=1 // pred_region
      %s29 = ssub.s32 512, 512
      %30 = vsyncadd [#allocation6], %s29
      %s31 = sshll.u32 [#allocation5], 4
      %s32 = int_to_ptr.vmem [resolvable:$true] %s31
      %37 = dma.hbm_to_vmem [thread:$0]  %s1, 512, %s32, [#allocation6], 128, 128, 8
    $region9: #{tpu_custom_call.1} parent=1 // pred_fallthru
      _
    // Predicated region
    $region10: #{tpu_custom_call.1} parent=1 // pred_check
      _
    $region11: #{tpu_custom_call.1} parent=1 // pred_check_branch
      %39 = sbr.rel (0) target = $region13
    $region12: #{tpu_custom_call.1} parent=1 // pred_region
      %s41 = ssub.s32 64, 64
      %42 = vsyncadd [#allocation6], %s41
      %s44 = sshll.u32 [#allocation7], 4
      %s45 = int_to_ptr.vmem [resolvable:$true] %s44
      %47 = dma.hbm_to_vmem [thread:$0]  %s2, 64, %s45, [#allocation6]
    $region13: #{tpu_custom_call.1} parent=1 // pred_fallthru
      _
    // Predicated region
    $region14: #{tpu_custom_call.1} parent=1 // pred_check
      _
    $region15: #{tpu_custom_call.1} parent=1 // pred_check_branch
      %49 = sbr.rel (0) target = $region17
    $region16: #{tpu_custom_call.1} parent=1 // pred_region
      %s51 = ssub.s32 2048, 2048
      %52 = vsyncadd [#allocation9], %s51
      %s53 = sshll.u32 [#allocation8], 4
      %s54 = int_to_ptr.vmem [resolvable:$true] %s53
      %59 = dma.hbm_to_vmem [thread:$0]  %s3, 2048, %s54, [#allocation9], 128, 128, 8
    $region17: #{tpu_custom_call.1} parent=1 // pred_fallthru
      _
    // Predicated region
    $region18: #{tpu_custom_call.1} parent=1 // pred_check
      _
    $region19: #{tpu_custom_call.1} parent=1 // pred_check_branch
      %61 = sbr.rel (0) target = $region21
    $region20: #{tpu_custom_call.1} parent=1 // pred_region
      _
    $region21: #{tpu_custom_call.1} parent=1 // pred_fallthru
      _
    // Predicated region
    $region22: #{tpu_custom_call.1} parent=1 // pred_check
      _
    $region23: #{tpu_custom_call.1} parent=1 // pred_check_branch
      %63 = sbr.rel (0) target = $region25
    $region24: #{tpu_custom_call.1} parent=1 // pred_region
      %s65 = ssub.s32 2048, 2048
      %66 = vsyncadd [#allocation9], %s65
      %s67 = sshll.u32 [#allocation10], 4
      %s68 = int_to_ptr.vmem [resolvable:$true] %s67
      %73 = dma.hbm_to_vmem [thread:$0]  %s5, 2048, %s68, [#allocation9], 128, 128, 8
    $region25: #{tpu_custom_call.1} parent=1 // pred_fallthru
      _
    // Predicated region
    $region26: #{tpu_custom_call.1} parent=1 // pred_check
      _
    $region27: #{tpu_custom_call.1} parent=1 // pred_check_branch
      %75 = sbr.rel (0) target = $region29
    $region28: #{tpu_custom_call.1} parent=1 // pred_region
      _
    $region29: #{tpu_custom_call.1} parent=1 // pred_fallthru
      _
    // Predicated region
    $region30: #{tpu_custom_call.1} parent=1 // pred_check
      _
    $region31: #{tpu_custom_call.1} parent=1 // pred_check_branch
      %77 = sbr.rel (0) target = $region33
    $region32: #{tpu_custom_call.1} parent=1 // pred_region
      %78 = dma.done [#allocation3], 128
    $region33: #{tpu_custom_call.1} parent=1 // pred_fallthru
      _
    // Predicated region
    $region34: #{tpu_custom_call.1} parent=1 // pred_check
      _
    $region35: #{tpu_custom_call.1} parent=1 // pred_check_branch
      %80 = sbr.rel (0) target = $region37
    $region36: #{tpu_custom_call.1} parent=1 // pred_region
      %81 = dma.done [#allocation6], 512
    $region37: #{tpu_custom_call.1} parent=1 // pred_fallthru
      _
    // Predicated region
    $region38: #{tpu_custom_call.1} parent=1 // pred_check
      _
    $region39: #{tpu_custom_call.1} parent=1 // pred_check_branch
      %83 = sbr.rel (0) target = $region41
    $region40: #{tpu_custom_call.1} parent=1 // pred_region
      %84 = dma.done [#allocation6], 64
    $region41: #{tpu_custom_call.1} parent=1 // pred_fallthru
      _
    // Predicated region
    $region42: #{tpu_custom_call.1} parent=1 // pred_check
      _
    $region43: #{tpu_custom_call.1} parent=1 // pred_check_branch
      %86 = sbr.rel (0) target = $region45
    $region44: #{tpu_custom_call.1} parent=1 // pred_region
      %87 = dma.done [#allocation9], 2048
    $region45: #{tpu_custom_call.1} parent=1 // pred_fallthru
      _
    // Predicated region
    $region46: #{tpu_custom_call.1} parent=1 // pred_check
      _
    $region47: #{tpu_custom_call.1} parent=1 // pred_check_branch
      %89 = sbr.rel (0) target = $region49
    $region48: #{tpu_custom_call.1} parent=1 // pred_region
      %90 = dma.done [#allocation9], 2048
    $region49: #{tpu_custom_call.1} parent=1 // pred_fallthru
      _
    %v91 = vld [vmem:[#allocation2] sm:$0xff]
    %v92 = vld [vmem:[#allocation5] sm:$0xff]
    %v93 = vld [vmem:[#allocation5 + $0x8] sm:$0xff]
    %v94 = vld [vmem:[#allocation5 + $0x10] sm:$0xff]
    %v95 = vld [vmem:[#allocation5 + $0x18] sm:$0xff]
    %v96 = vld [vmem:[#allocation7] sm:$0x1]
    %v97 = vlaneseq
    %v98 = vshrl.u32 %v97, 7
    %v99 = vsub.s32 0, %v98
    %v100 = vrot.slane %v96, %v99
    %vm101 = vcmask 261120
    %v103 = vsel %vm101, %v91, 0
    %105 = vmatprep.subr.mxu0 0.0
    %106 = vmatpush1.msra.mxu0 0.0
    %107 = vmatprep.subr.mxu0 0.0
    %108 = vmatpush1.msra.mxu0 0.0
    %109 = vmatprep.subr.mxu0 0.0
    %110 = vmatpush1.msra.mxu0 0.0
    %111 = vmatprep.subr.mxu0 0.0
    %112 = vmatpush1.msra.mxu0 0.0
    %113 = vmatprep.subr.mxu0 0.0
    %114 = vmatpush1.msra.mxu0 0.0
    %115 = vmatprep.subr.mxu0 0.0
    %116 = vmatpush1.msra.mxu0 0.0
    %117 = vmatprep.subr.mxu0 0.0
    %118 = vmatpush1.msra.mxu0 0.0
    %119 = vmatprep.subr.mxu0 0.0
    %120 = vmatpush1.msra.mxu0 0.0
    %121 = vmatprep.subr.mxu0 0.0
    %122 = vmatpush1.msra.mxu0 0.0
    %123 = vmatprep.subr.mxu0 0.0
    %124 = vmatpush1.msra.mxu0 0.0
    %125 = vmatprep.subr.mxu0 0.0
    %126 = vmatpush1.msra.mxu0 0.0
    %127 = vmatprep.subr.mxu0 0.0
    %128 = vmatpush1.msra.mxu0 0.0
    %129 = vmatprep.subr.mxu0 0.0
    %130 = vmatpush1.msra.mxu0 %v95
    %131 = vmatprep.subr.mxu0 0.0
    %132 = vmatpush1.msra.mxu0 %v94
    %133 = vmatprep.subr.mxu0 0.0
    %134 = vmatpush1.msra.mxu0 %v93
    %135 = vmatprep.subr.mxu0 0.0
    %136 = vmatpush1.msra.mxu0 %v92
    %137 = vmatprep.subr.mxu0 0.0
    %138 = vmatpush2.msra.mxu0 0.0
    %139 = vmatprep.subr.mxu0 0.0
    %140 = vmatpush2.msra.mxu0 0.0
    %141 = vmatprep.subr.mxu0 0.0
    %142 = vmatpush2.msra.mxu0 0.0
    %143 = vmatprep.subr.mxu0 0.0
    %144 = vmatpush2.msra.mxu0 0.0
    %145 = vmatprep.subr.mxu0 0.0
    %146 = vmatpush2.msra.mxu0 0.0
    %147 = vmatprep.subr.mxu0 0.0
    %148 = vmatpush2.msra.mxu0 0.0
    %149 = vmatprep.subr.mxu0 0.0
    %150 = vmatpush2.msra.mxu0 0.0
    %151 = vmatprep.subr.mxu0 0.0
    %152 = vmatpush2.msra.mxu0 0.0
    %153 = vmatprep.subr.mxu0 0.0
    %154 = vmatpush2.msra.mxu0 0.0
    %155 = vmatprep.subr.mxu0 0.0
    %156 = vmatpush2.msra.mxu0 0.0
    %157 = vmatprep.subr.mxu0 0.0
    %158 = vmatpush2.msra.mxu0 0.0
    %159 = vmatprep.subr.mxu0 0.0
    %160 = vmatpush2.msra.mxu0 0.0
    %161 = vmatprep.subr.mxu0 0.0
    %162 = vmatpush2.msra.mxu0 0.0
    %163 = vmatprep.subr.mxu0 0.0
    %164 = vmatpush2.msra.mxu0 0.0
    %165 = vmatprep.subr.mxu0 0.0
    %166 = vmatpush2.msra.mxu0 0.0
    %167 = vmatprep.subr.mxu0 0.0
    %168 = vmatpush2.msra.mxu0 0.0
    %169 = vmatprep.mubr.f32.mxu0 0.0
    %170 = vmatmul.mubr.f32.gmra.mxu0 %v103
    %v171 = vpop.f32.mrf.mxu0
    %v172 = vadd.f32 %v100, %v171
    %v173 = vpop.f32.mrf.mxu0
    %174 = vdwg.mxu0
    %v175 = vmax.f32 %v172, 0.0
    %176 = vadd.xlane.f32.xlu0 %v175
    %v177 = vpop.xlane.xlu0 %176
    %v178 = vmul.f32 %v177, 0.015625
    %v179 = vlaneseq
    %v180 = vand.u32 %v179, 127
    %vm181 = vcmp.lt.s32.totalorder %v180, 64
    %v182 = vsub.f32 %v175, %v178
    %v183 = vsel %vm181, 1, 0
    %vm184 = vcmp.eq.s32.totalorder %v183, 1
    %v185 = vsel %vm184, %v182, 0.0
    %v186 = vmul.f32 %v185, %v185
    %187 = vadd.xlane.f32.xlu0 %v186
    %v188 = vpop.xlane.xlu0 %187
    %v189 = vmul.f32 %v188, 0.015625
    %v190 = vadd.f32 %v189, 1e-07
    %v191 = vrsqrt.pop %v190
    %v192 = vmul.f32 %v185, %v191
    %v193 = vld [vmem:[#allocation7 + $0x1] sm:$0x1]
    %v194 = vlaneseq
    %v195 = vshrl.u32 %v194, 7
    %v196 = vsub.s32 0, %v195
    %v197 = vrot.slane %v193, %v196
    %v198 = vmul.f32 %v192, %v197
    %v199 = vld [vmem:[#allocation7 + $0x2] sm:$0x1]
    %v200 = vlaneseq
    %v201 = vshrl.u32 %v200, 7
    %v202 = vsub.s32 0, %v201
    %v203 = vrot.slane %v199, %v202
    %v204 = vadd.f32 %v198, %v203
    %v205 = vld [vmem:[#allocation8] sm:$0xff]
    %v206 = vld [vmem:[#allocation8 + $0x8] sm:$0xff]
    %v207 = vld [vmem:[#allocation8 + $0x10] sm:$0xff]
    %v208 = vld [vmem:[#allocation8 + $0x18] sm:$0xff]
    %v209 = vld [vmem:[#allocation8 + $0x20] sm:$0xff]
    %v210 = vld [vmem:[#allocation8 + $0x28] sm:$0xff]
    %v211 = vld [vmem:[#allocation8 + $0x30] sm:$0xff]
    %v212 = vld [vmem:[#allocation8 + $0x38] sm:$0xff]
    %v213 = vld [vmem:[#allocation8 + $0x40] sm:$0xff]
    %v214 = vld [vmem:[#allocation8 + $0x48] sm:$0xff]
    %v215 = vld [vmem:[#allocation8 + $0x50] sm:$0xff]
    %v216 = vld [vmem:[#allocation8 + $0x58] sm:$0xff]
    %v217 = vld [vmem:[#allocation8 + $0x60] sm:$0xff]
    %v218 = vld [vmem:[#allocation8 + $0x68] sm:$0xff]
    %v219 = vld [vmem:[#allocation8 + $0x70] sm:$0xff]
    %v220 = vld [vmem:[#allocation8 + $0x78] sm:$0xff]
    %v221 = vld [vmem:[%s4] sm:$0x1]
    %v222 = vlaneseq
    %v223 = vshrl.u32 %v222, 7
    %v224 = vsub.s32 0, %v223
    %v225 = vrot.slane %v221, %v224
    %226 = vmatprep.subr.mxu0 0.0
    %227 = vmatpush1.msra.mxu0 %v220
    %228 = vmatprep.subr.mxu0 0.0
    %229 = vmatpush1.msra.mxu0 %v219
    %230 = vmatprep.subr.mxu0 0.0
    %231 = vmatpush1.msra.mxu0 %v218
    %232 = vmatprep.subr.mxu0 0.0
    %233 = vmatpush1.msra.mxu0 %v217
    %234 = vmatprep.subr.mxu0 0.0
    %235 = vmatpush1.msra.mxu0 %v216
    %236 = vmatprep.subr.mxu0 0.0
    %237 = vmatpush1.msra.mxu0 %v215
    %238 = vmatprep.subr.mxu0 0.0
    %239 = vmatpush1.msra.mxu0 %v214
    %240 = vmatprep.subr.mxu0 0.0
    %241 = vmatpush1.msra.mxu0 %v213
    %242 = vmatprep.subr.mxu0 0.0
    %243 = vmatpush1.msra.mxu0 %v212
    %244 = vmatprep.subr.mxu0 0.0
    %245 = vmatpush1.msra.mxu0 %v211
    %246 = vmatprep.subr.mxu0 0.0
    %247 = vmatpush1.msra.mxu0 %v210
    %248 = vmatprep.subr.mxu0 0.0
    %249 = vmatpush1.msra.mxu0 %v209
    %250 = vmatprep.subr.mxu0 0.0
    %251 = vmatpush1.msra.mxu0 %v208
    %252 = vmatprep.subr.mxu0 0.0
    %253 = vmatpush1.msra.mxu0 %v207
    %254 = vmatprep.subr.mxu0 0.0
    %255 = vmatpush1.msra.mxu0 %v206
    %256 = vmatprep.subr.mxu0 0.0
    %257 = vmatpush1.msra.mxu0 %v205
    %258 = vmatprep.subr.mxu0 0.0
    %259 = vmatpush2.msra.mxu0 0.0
    %260 = vmatprep.subr.mxu0 0.0
    %261 = vmatpush2.msra.mxu0 0.0
    %262 = vmatprep.subr.mxu0 0.0
    %263 = vmatpush2.msra.mxu0 0.0
    %264 = vmatprep.subr.mxu0 0.0
    %265 = vmatpush2.msra.mxu0 0.0
    %266 = vmatprep.subr.mxu0 0.0
    %267 = vmatpush2.msra.mxu0 0.0
    %268 = vmatprep.subr.mxu0 0.0
    %269 = vmatpush2.msra.mxu0 0.0
    %270 = vmatprep.subr.mxu0 0.0
    %271 = vmatpush2.msra.mxu0 0.0
    %272 = vmatprep.subr.mxu0 0.0
    %273 = vmatpush2.msra.mxu0 0.0
    %274 = vmatprep.subr.mxu0 0.0
    %275 = vmatpush2.msra.mxu0 0.0
    %276 = vmatprep.subr.mxu0 0.0
    %277 = vmatpush2.msra.mxu0 0.0
    %278 = vmatprep.subr.mxu0 0.0
    %279 = vmatpush2.msra.mxu0 0.0
    %280 = vmatprep.subr.mxu0 0.0
    %281 = vmatpush2.msra.mxu0 0.0
    %282 = vmatprep.subr.mxu0 0.0
    %283 = vmatpush2.msra.mxu0 0.0
    %284 = vmatprep.subr.mxu0 0.0
    %285 = vmatpush2.msra.mxu0 0.0
    %286 = vmatprep.subr.mxu0 0.0
    %287 = vmatpush2.msra.mxu0 0.0
    %288 = vmatprep.subr.mxu0 0.0
    %289 = vmatpush2.msra.mxu0 0.0
    %290 = vmatprep.mubr.f32.mxu0 0.0
    %291 = vmatmul.mubr.f32.gmra.mxu0 %v204
    %v292 = vpop.f32.mrf.mxu0
    %v293 = vadd.f32 %v225, %v292
    %v294 = vpop.f32.mrf.mxu0
    %295 = vdwg.mxu0
    %v296 = vmax.f32 %v293, 0.0
    %297 = vadd.xlane.f32.xlu0 %v296
    %v298 = vpop.xlane.xlu0 %297
    %v299 = vmul.f32 %v298, 0.020833334
    %vm300 = vcmp.lt.s32.totalorder %v180, 48
    %v301 = vsub.f32 %v296, %v299
    %v302 = vsel %vm300, 1, 0
    %vm303 = vcmp.eq.s32.totalorder %v302, 1
    %v304 = vsel %vm303, %v301, 0.0
    %v305 = vmul.f32 %v304, %v304
    %306 = vadd.xlane.f32.xlu0 %v305
    %v307 = vpop.xlane.xlu0 %306
    %v308 = vmul.f32 %v307, 0.020833334
    %v309 = vadd.f32 %v308, 1e-07
    %v310 = vrsqrt.pop %v309
    %v311 = vmul.f32 %v304, %v310
    %v312 = vld [vmem:[%s4 + $0x1] sm:$0x1]
    %v313 = vlaneseq
    %v314 = vshrl.u32 %v313, 7
    %v315 = vsub.s32 0, %v314
    %v316 = vrot.slane %v312, %v315
    %v317 = vmul.f32 %v311, %v316
    %v318 = vld [vmem:[%s4 + $0x2] sm:$0x1]
    %v319 = vlaneseq
    %v320 = vshrl.u32 %v319, 7
    %v321 = vsub.s32 0, %v320
    %v322 = vrot.slane %v318, %v321
    %v323 = vadd.f32 %v317, %v322
    %v324 = vld [vmem:[#allocation10] sm:$0xff]
    %v325 = vld [vmem:[#allocation10 + $0x8] sm:$0xff]
    %v326 = vld [vmem:[#allocation10 + $0x10] sm:$0xff]
    %v327 = vld [vmem:[#allocation10 + $0x18] sm:$0xff]
    %v328 = vld [vmem:[#allocation10 + $0x20] sm:$0xff]
    %v329 = vld [vmem:[#allocation10 + $0x28] sm:$0xff]
    %v330 = vld [vmem:[#allocation10 + $0x30] sm:$0xff]
    %v331 = vld [vmem:[#allocation10 + $0x38] sm:$0xff]
    %v332 = vld [vmem:[#allocation10 + $0x40] sm:$0xff]
    %v333 = vld [vmem:[#allocation10 + $0x48] sm:$0xff]
    %v334 = vld [vmem:[#allocation10 + $0x50] sm:$0xff]
    %v335 = vld [vmem:[#allocation10 + $0x58] sm:$0xff]
    %v336 = vld [vmem:[#allocation10 + $0x60] sm:$0xff]
    %v337 = vld [vmem:[#allocation10 + $0x68] sm:$0xff]
    %v338 = vld [vmem:[#allocation10 + $0x70] sm:$0xff]
    %v339 = vld [vmem:[#allocation10 + $0x78] sm:$0xff]
    %v340 = vld [vmem:[%s6] sm:$0x1]
    %v342 = vlaneseq
    %v343 = vshrl.u32 %v342, 7
    %v344 = vsub.s32 0, %v343
    %v345 = vrot.slane %v340, %v344
    %347 = vmatprep.subr.mxu0 0.0
    %348 = vmatpush1.msra.mxu0 %v339
    %349 = vmatprep.subr.mxu0 0.0
    %350 = vmatpush1.msra.mxu0 %v338
    %351 = vmatprep.subr.mxu0 0.0
    %352 = vmatpush1.msra.mxu0 %v337
    %353 = vmatprep.subr.mxu0 0.0
    %354 = vmatpush1.msra.mxu0 %v336
    %355 = vmatprep.subr.mxu0 0.0
    %356 = vmatpush1.msra.mxu0 %v335
    %357 = vmatprep.subr.mxu0 0.0
    %358 = vmatpush1.msra.mxu0 %v334
    %359 = vmatprep.subr.mxu0 0.0
    %360 = vmatpush1.msra.mxu0 %v333
    %361 = vmatprep.subr.mxu0 0.0
    %362 = vmatpush1.msra.mxu0 %v332
    %363 = vmatprep.subr.mxu0 0.0
    %364 = vmatpush1.msra.mxu0 %v331
    %365 = vmatprep.subr.mxu0 0.0
    %366 = vmatpush1.msra.mxu0 %v330
    %367 = vmatprep.subr.mxu0 0.0
    %368 = vmatpush1.msra.mxu0 %v329
    %369 = vmatprep.subr.mxu0 0.0
    %370 = vmatpush1.msra.mxu0 %v328
    %371 = vmatprep.subr.mxu0 0.0
    %372 = vmatpush1.msra.mxu0 %v327
    %373 = vmatprep.subr.mxu0 0.0
    %374 = vmatpush1.msra.mxu0 %v326
    %375 = vmatprep.subr.mxu0 0.0
    %376 = vmatpush1.msra.mxu0 %v325
    %377 = vmatprep.subr.mxu0 0.0
    %378 = vmatpush1.msra.mxu0 %v324
    %379 = vmatprep.subr.mxu0 0.0
    %380 = vmatpush2.msra.mxu0 0.0
    %381 = vmatprep.subr.mxu0 0.0
    %382 = vmatpush2.msra.mxu0 0.0
    %383 = vmatprep.subr.mxu0 0.0
    %384 = vmatpush2.msra.mxu0 0.0
    %385 = vmatprep.subr.mxu0 0.0
    %386 = vmatpush2.msra.mxu0 0.0
    %387 = vmatprep.subr.mxu0 0.0
    %388 = vmatpush2.msra.mxu0 0.0
    %389 = vmatprep.subr.mxu0 0.0
    %390 = vmatpush2.msra.mxu0 0.0
    %391 = vmatprep.subr.mxu0 0.0
    %392 = vmatpush2.msra.mxu0 0.0
    %393 = vmatprep.subr.mxu0 0.0
    %394 = vmatpush2.msra.mxu0 0.0
    %395 = vmatprep.subr.mxu0 0.0
    %396 = vmatpush2.msra.mxu0 0.0
    %397 = vmatprep.subr.mxu0 0.0
    %398 = vmatpush2.msra.mxu0 0.0
    %399 = vmatprep.subr.mxu0 0.0
    %400 = vmatpush2.msra.mxu0 0.0
    %401 = vmatprep.subr.mxu0 0.0
    %402 = vmatpush2.msra.mxu0 0.0
    %403 = vmatprep.subr.mxu0 0.0
    %404 = vmatpush2.msra.mxu0 0.0
    %405 = vmatprep.subr.mxu0 0.0
    %406 = vmatpush2.msra.mxu0 0.0
    %407 = vmatprep.subr.mxu0 0.0
    %408 = vmatpush2.msra.mxu0 0.0
    %409 = vmatprep.subr.mxu0 0.0
    %410 = vmatpush2.msra.mxu0 0.0
    %411 = vmatprep.mubr.f32.mxu0 0.0
    %412 = vmatmul.mubr.f32.gmra.mxu0 %v323
    %v413 = vpop.f32.mrf.mxu0
    %v414 = vadd.f32 %v345, %v413
    %v415 = vpop.f32.mrf.mxu0
    %416 = vdwg.mxu0
    %417 = vst [vmem:[#allocation11] sm:$0xff] %v414
    // Predicated region
    $region50: #{tpu_custom_call.1} parent=1 // pred_check
      _
    $region51: #{tpu_custom_call.1} parent=1 // pred_check_branch
      %419 = sbr.rel (0) target = $region53
    $region52: #{tpu_custom_call.1} parent=1 // pred_region
      %s421 = ssub.s32 128, 128
      %422 = vsyncadd [#allocation4], %s421
      %s424 = sshll.u32 [#allocation11], 4
      %s425 = int_to_ptr.vmem [resolvable:$true] %s424
      %427 = dma.vmem_to_hbm [thread:$0]  %s425, 128, %s7, [#allocation4]
    $region53: #{tpu_custom_call.1} parent=1 // pred_fallthru
      _
    // Predicated region
    $region54: #{tpu_custom_call.1} parent=1 // pred_check
      _
    $region55: #{tpu_custom_call.1} parent=1 // pred_check_branch
      %429 = sbr.rel (0) target = $region57
    $region56: #{tpu_custom_call.1} parent=1 // pred_region
      %430 = dma.done [#allocation4], 128
    $region57: #{tpu_custom_call.1} parent=1 // pred_fallthru
      _
    %431 = vsyncpa [#allocation3], 1
    %432 = vsyncpa [#allocation6], 1
    %433 = vsyncpa [#allocation9], 1
    %434 = vsyncpa [#allocation4], 1

</llo_original>
